<compile_context>
chip_gen: v7x
topology: tpu7x:2x2x1
jax: 0.10.0
libtpu: 0.0.40
codegen_flags: <defaults>
</compile_context>

<pallas_src>
import jax
import jax.numpy as jnp
from jax.experimental import pallas as pl
from jax.experimental.pallas import tpu as pltpu


def _mlp_kernel(xT_ref, w1_ref, b1_ref, w2_ref, b2_ref, oT_ref):
    # xT: [2, TN]   w1: [H, 2]   b1: [H, 1]   w2: [D, H]   b2: [D, 1]   oT: [D, TN]
    xT = xT_ref[...].astype(jnp.float32)
    w1 = w1_ref[...].astype(jnp.float32)
    b1 = b1_ref[...].astype(jnp.float32)

    # First layer (K=2): two broadcast FMAs on the VPU instead of a degenerate
    # MXU matmul.  hT = w1 @ x.T + b1  -> [H, TN]
    hT = w1[:, 0:1] * xT[0:1, :] + w1[:, 1:2] * xT[1:2, :] + b1
    hT = jnp.maximum(hT, 0.0)  # ReLU

    # Second layer on the MXU, lane-dense on TN: [D, H] @ [H, TN] -> [D, TN]
    outT = jnp.dot(w2_ref[...].astype(jnp.float32), hT,
                   preferred_element_type=jnp.float32)
    outT = outT + b2_ref[...].astype(jnp.float32)
    oT_ref[...] = outT.astype(oT_ref.dtype)


def spatial_encoder_pallas(state, w1, b1, w2, b2):
    """state: [..., 2]; w1: [hidden, 2]; b1: [hidden]; w2: [head, hidden]; b2: [head]."""
    hidden_dim = w1.shape[0]
    head_dim = w2.shape[0]
    lead_shape = state.shape[:-1]
    out_dtype = state.dtype

    x = state.reshape(-1, 2)
    n = x.shape[0]

    # Row tile: multiple of 128 (lane width); pad N up to a whole number of tiles.
    TN = min(2048, ((n + 127) // 128) * 128)
    n_tiles = pl.cdiv(n, TN)
    n_pad = n_tiles * TN

    # Lane-dense (transposed) input slab: [2, Np]; padded rows are sliced away.
    xT = jnp.pad(x.T, ((0, 0), (0, n_pad - n)))

    # Biases as column vectors for clean sublane broadcasting in the kernel.
    b1c = b1.reshape(hidden_dim, 1)
    b2c = b2.reshape(head_dim, 1)

    itemsize = jnp.dtype(out_dtype).itemsize
    cost = pl.CostEstimate(
        flops=2 * n * hidden_dim * (2 + head_dim),
        transcendentals=0,
        bytes_accessed=n * (2 + head_dim) * itemsize
        + (w1.size + b1.size + w2.size + b2.size) * jnp.dtype(w1.dtype).itemsize,
    )

    outT = pl.pallas_call(
        _mlp_kernel,
        out_shape=jax.ShapeDtypeStruct((head_dim, n_pad), out_dtype),
        grid_spec=pltpu.PrefetchScalarGridSpec(
            num_scalar_prefetch=0,
            grid=(n_tiles,),
            in_specs=[
                pl.BlockSpec((2, TN), lambda i: (0, i)),
                pl.BlockSpec((hidden_dim, 2), lambda i: (0, 0)),
                pl.BlockSpec((hidden_dim, 1), lambda i: (0, 0)),
                pl.BlockSpec((head_dim, hidden_dim), lambda i: (0, 0)),
                pl.BlockSpec((head_dim, 1), lambda i: (0, 0)),
            ],
            out_specs=pl.BlockSpec((head_dim, TN), lambda i: (0, i)),
        ),
        compiler_params=pltpu.CompilerParams(
            dimension_semantics=("parallel",)),
        cost_estimate=cost,
    )(xT, w1, b1c, w2, b2c)

    # Layout plumbing back to row-major [..., D].
    out = outT[:, :n].T
    return out.reshape(*lead_shape, head_dim)


def init_params(key, hidden_dim, head_dim):
    """Deterministic init mimicking nn.Linear default (uniform +/- 1/sqrt(fan_in))."""
    k1, k2, k3, k4 = jax.random.split(key, 4)
    bound1 = 1.0 / jnp.sqrt(2.0)
    bound2 = 1.0 / jnp.sqrt(float(hidden_dim))
    w1 = jax.random.uniform(k1, (hidden_dim, 2), jnp.float32, -bound1, bound1)
    b1 = jax.random.uniform(k2, (hidden_dim,), jnp.float32, -bound1, bound1)
    w2 = jax.random.uniform(k3, (head_dim, hidden_dim), jnp.float32, -bound2, bound2)
    b2 = jax.random.uniform(k4, (head_dim,), jnp.float32, -bound2, bound2)
    return w1, b1, w2, b2


def reference(state, w1, b1, w2, b2):
    h = jnp.maximum(state @ w1.T + b1, 0.0)
    return h @ w2.T + b2


if __name__ == "__main__":
    hidden_dim = 32
    head_dim = 8
    batch, seq = 2, 8

    key = jax.random.PRNGKey(0)
    kp, kx = jax.random.split(key)
    w1, b1, w2, b2 = init_params(kp, hidden_dim, head_dim)

    # Sampled 2D locations: [batch, seq, 2]
    state = jax.random.normal(kx, (batch, seq, 2), jnp.float32)

    out = spatial_encoder_pallas(state, w1, b1, w2, b2)
    out = jax.block_until_ready(out)

    ref = reference(state, w1, b1, w2, b2)
    assert out.shape == (batch, seq, head_dim)
    assert jnp.allclose(out, ref, atol=1e-5, rtol=1e-5)

    print("KERNEL_OK")
</pallas_src>

<mosaic_0001>
module attributes {stable_mosaic.version = 11 : i64} {
  func.func @_mlp_kernel(%arg0: i32, %arg1: memref<2x128xf32, #tpu.memory_space<vmem>>, %arg2: memref<32x2xf32, #tpu.memory_space<vmem>>, %arg3: memref<32x1xf32, #tpu.memory_space<vmem>>, %arg4: memref<8x32xf32, #tpu.memory_space<vmem>>, %arg5: memref<8x1xf32, #tpu.memory_space<vmem>>, %arg6: memref<8x128xf32, #tpu.memory_space<vmem>>) attributes {dimension_semantics = [#tpu.dimension_semantics<parallel>], iteration_bounds = array<i64: 1>, scalar_prefetch = 0 : i64, scratch_operands = 0 : i64, tpu.core_type = #tpu.core_type<tc>, window_params = [{transform_indices = @transform_0, window_bounds = array<i64: 2, 128>}, {pipeline_mode = #tpu.pipeline_mode<synchronous>, transform_indices = @transform_1, window_bounds = array<i64: 32, 2>}, {pipeline_mode = #tpu.pipeline_mode<synchronous>, transform_indices = @transform_2, window_bounds = array<i64: 32, 1>}, {pipeline_mode = #tpu.pipeline_mode<synchronous>, transform_indices = @transform_3, window_bounds = array<i64: 8, 32>}, {pipeline_mode = #tpu.pipeline_mode<synchronous>, transform_indices = @transform_4, window_bounds = array<i64: 8, 1>}, {transform_indices = @transform_5, window_bounds = array<i64: 8, 128>}]} {
    %c0 = arith.constant 0 : index
    %c0_0 = arith.constant 0 : index
    %0 = vector.load %arg1[%c0, %c0_0] : memref<2x128xf32, #tpu.memory_space<vmem>>, vector<2x128xf32>
    %c0_1 = arith.constant 0 : index
    %c0_2 = arith.constant 0 : index
    %1 = vector.load %arg2[%c0_1, %c0_2] : memref<32x2xf32, #tpu.memory_space<vmem>>, vector<32x2xf32>
    %c0_3 = arith.constant 0 : index
    %c0_4 = arith.constant 0 : index
    %2 = vector.load %arg3[%c0_3, %c0_4] : memref<32x1xf32, #tpu.memory_space<vmem>>, vector<32x1xf32>
    %3 = vector.extract_strided_slice %1 {offsets = [0, 0], sizes = [32, 1], strides = [1, 1]} : vector<32x2xf32> to vector<32x1xf32>
    %4 = vector.extract_strided_slice %0 {offsets = [0, 0], sizes = [1, 128], strides = [1, 1]} : vector<2x128xf32> to vector<1x128xf32>
    %5 = vector.broadcast %3 : vector<32x1xf32> to vector<32x128xf32>
    %6 = vector.broadcast %4 : vector<1x128xf32> to vector<32x128xf32>
    %7 = arith.mulf %5, %6 : vector<32x128xf32>
    %8 = vector.extract_strided_slice %1 {offsets = [0, 1], sizes = [32, 1], strides = [1, 1]} : vector<32x2xf32> to vector<32x1xf32>
    %9 = vector.extract_strided_slice %0 {offsets = [1, 0], sizes = [1, 128], strides = [1, 1]} : vector<2x128xf32> to vector<1x128xf32>
    %10 = vector.broadcast %8 : vector<32x1xf32> to vector<32x128xf32>
    %11 = vector.broadcast %9 : vector<1x128xf32> to vector<32x128xf32>
    %12 = arith.mulf %10, %11 : vector<32x128xf32>
    %13 = arith.addf %7, %12 : vector<32x128xf32>
    %14 = vector.broadcast %2 : vector<32x1xf32> to vector<32x128xf32>
    %15 = arith.addf %13, %14 : vector<32x128xf32>
    %cst = arith.constant 0.000000e+00 : f32
    %16 = vector.broadcast %cst : f32 to vector<32x128xf32>
    %17 = arith.maximumf %15, %16 : vector<32x128xf32>
    %c0_5 = arith.constant 0 : index
    %c0_6 = arith.constant 0 : index
    %18 = vector.load %arg4[%c0_5, %c0_6] : memref<8x32xf32, #tpu.memory_space<vmem>>, vector<8x32xf32>
    %cst_7 = arith.constant dense<0.000000e+00> : vector<8x128xf32>
    %19 = tpu.matmul %18, %17, %cst_7 {dimension_numbers = #tpu.dot_dimension_numbers<[1], [0], [0], [1], [0, 0, 1, 1], [], []>} : vector<8x32xf32>, vector<32x128xf32>, vector<8x128xf32> -> vector<8x128xf32>
    %c0_8 = arith.constant 0 : index
    %c0_9 = arith.constant 0 : index
    %20 = vector.load %arg5[%c0_8, %c0_9] : memref<8x1xf32, #tpu.memory_space<vmem>>, vector<8x1xf32>
    %21 = vector.broadcast %20 : vector<8x1xf32> to vector<8x128xf32>
    %22 = arith.addf %19, %21 : vector<8x128xf32>
    %c0_10 = arith.constant 0 : index
    %c0_11 = arith.constant 0 : index
    %23 = vector.load %arg6[%c0_10, %c0_11] : memref<8x128xf32, #tpu.memory_space<vmem>>, vector<8x128xf32>
    tpu.vector_store %arg6[%c0_10, %c0_11], %22 {strides = array<i32>} : memref<8x128xf32, #tpu.memory_space<vmem>>, vector<8x128xf32>,
    return
  }
  func.func @transform_0(%arg0: i32) -> (i32, i32) {
    %c0_i32 = arith.constant 0 : i32
    %c0_i32_0 = arith.constant 0 : i32
    return %c0_i32, %arg0 : i32, i32
  }
  func.func @transform_1(%arg0: i32) -> (i32, i32) {
    %c0_i32 = arith.constant 0 : i32
    %c0_i32_0 = arith.constant 0 : i32
    %c0_i32_1 = arith.constant 0 : i32
    return %c0_i32, %c0_i32_0 : i32, i32
  }
  func.func @transform_2(%arg0: i32) -> (i32, i32) {
    %c0_i32 = arith.constant 0 : i32
    %c0_i32_0 = arith.constant 0 : i32
    %c0_i32_1 = arith.constant 0 : i32
    return %c0_i32, %c0_i32_0 : i32, i32
  }
  func.func @transform_3(%arg0: i32) -> (i32, i32) {
    %c0_i32 = arith.constant 0 : i32
    %c0_i32_0 = arith.constant 0 : i32
    %c0_i32_1 = arith.constant 0 : i32
    return %c0_i32, %c0_i32_0 : i32, i32
  }
  func.func @transform_4(%arg0: i32) -> (i32, i32) {
    %c0_i32 = arith.constant 0 : i32
    %c0_i32_0 = arith.constant 0 : i32
    %c0_i32_1 = arith.constant 0 : i32
    return %c0_i32, %c0_i32_0 : i32, i32
  }
  func.func @transform_5(%arg0: i32) -> (i32, i32) {
    %c0_i32 = arith.constant 0 : i32
    %c0_i32_0 = arith.constant 0 : i32
    return %c0_i32, %arg0 : i32, i32
  }
}

</mosaic_0001>

<llo_original>
// kernel: tpu_custom_call.1
$region0: #{tpu_custom_call.1}
  #allocation0 [shape = 'u32[]', space=smem, size = 0x4, offset = 0x4, fixed_abs, tag = 'smem constant byte address 0x4 - core index']
  #allocation1 [shape = 'u32[144,128]{1,0:T(1,128)}', space=vmem, size = 0x12000, scoped, tag = 'internal scratch']
  %s0 = inlined_call_operand.vmem [shape: f32[2,128], index: 0, kind: input, shape index: {}]
  %s1 = inlined_call_operand.vmem [shape: f32[32,2], index: 1, kind: input, shape index: {}]
  %s2 = inlined_call_operand.vmem [shape: f32[32,1], index: 2, kind: input, shape index: {}]
  %s3 = inlined_call_operand.vmem [shape: f32[8,32], index: 3, kind: input, shape index: {}]
  %s4 = inlined_call_operand.vmem [shape: f32[8,1], index: 4, kind: input, shape index: {}]
  %s5 = inlined_call_operand.hbm [shape: f32[8,128], index: 5, kind: output, shape index: {}]
  %s6 = sld [smem:[#allocation0]]
  $region30: #{tpu_custom_call.1} parent=0
    _
  %s8 = ssub.s32 1, %s6
  %s9 = scalar_select 0, %s8, %s6
  $region1: #{tpu_custom_call.1} parent=0
    #allocation2 [shape = 'u8[4096]{0}', space=vmem, size = 0x1000, scoped, tag = 'output window, operand 0, single buffered']
    #allocation3 [shape = 's32[1]{0}', space=sflag, size = 0x4, scoped, tag = 'scoped memory for tpu_custom_call.1']
    %10 = vsyncpa [#allocation3], 0
    // Predicated region
    $region2: #{tpu_custom_call.1} parent=1 // pred_check
      _
    $region3: #{tpu_custom_call.1} parent=1 // pred_check_branch
      %12 = sbr.rel (0) target = $region5
    $region4: #{tpu_custom_call.1} parent=1 // pred_region
      _
    $region5: #{tpu_custom_call.1} parent=1 // pred_fallthru
      _
    // Predicated region
    $region6: #{tpu_custom_call.1} parent=1 // pred_check
      _
    $region7: #{tpu_custom_call.1} parent=1 // pred_check_branch
      %14 = sbr.rel (0) target = $region9
    $region8: #{tpu_custom_call.1} parent=1 // pred_region
      _
    $region9: #{tpu_custom_call.1} parent=1 // pred_fallthru
      _
    // Predicated region
    $region10: #{tpu_custom_call.1} parent=1 // pred_check
      _
    $region11: #{tpu_custom_call.1} parent=1 // pred_check_branch
      %16 = sbr.rel (0) target = $region13
    $region12: #{tpu_custom_call.1} parent=1 // pred_region
      _
    $region13: #{tpu_custom_call.1} parent=1 // pred_fallthru
      _
    // Predicated region
    $region14: #{tpu_custom_call.1} parent=1 // pred_check
      _
    $region15: #{tpu_custom_call.1} parent=1 // pred_check_branch
      %18 = sbr.rel (0) target = $region17
    $region16: #{tpu_custom_call.1} parent=1 // pred_region
      _
    $region17: #{tpu_custom_call.1} parent=1 // pred_fallthru
      _
    // Predicated region
    $region18: #{tpu_custom_call.1} parent=1 // pred_check
      _
    $region19: #{tpu_custom_call.1} parent=1 // pred_check_branch
      %20 = sbr.rel (0) target = $region21
    $region20: #{tpu_custom_call.1} parent=1 // pred_region
      _
    $region21: #{tpu_custom_call.1} parent=1 // pred_fallthru
      _
    %v21 = vld [vmem:[%s0] sm:$0x3]
    %v22 = vld [vmem:[%s1] sm:$0xff]
    %v23 = vld [vmem:[%s1 + $0x8] sm:$0xff]
    %v24 = vld [vmem:[%s1 + $0x10] sm:$0xff]
    %v25 = vld [vmem:[%s1 + $0x18] sm:$0xff]
    %v26 = vld [vmem:[%s2] sm:$0xff]
    %v27 = vld [vmem:[%s2 + $0x8] sm:$0xff]
    %v28 = vld [vmem:[%s2 + $0x10] sm:$0xff]
    %v29 = vld [vmem:[%s2 + $0x18] sm:$0xff]
    %31 = vset.pattern.permute.xlu0 0
    %32 = vperm.xlu0 %31, %v22
    %v33 = vpop.permute.xlu0 %32
    %36 = vset.pattern.permute.xlu0 0
    %37 = vperm.xlu0 %36, %v23
    %v38 = vpop.permute.xlu0 %37
    %41 = vset.pattern.permute.xlu0 0
    %42 = vperm.xlu0 %41, %v24
    %v43 = vpop.permute.xlu0 %42
    %46 = vset.pattern.permute.xlu0 0
    %47 = vperm.xlu0 %46, %v25
    %v48 = vpop.permute.xlu0 %47
    %v50 = vlaneseq
    %v51 = vshrl.u32 %v50, 7
    %v52 = vsub.s32 0, %v51
    %v53 = vrot.slane %v21, %v52
    %v54 = vmul.f32 %v33, %v53
    %v55 = vmul.f32 %v38, %v53
    %v56 = vmul.f32 %v43, %v53
    %v57 = vmul.f32 %v48, %v53
    %58 = vset.pattern.permute.xlu0 1
    %59 = vperm.xlu0 %58, %v22
    %v60 = vpop.permute.xlu0 %59
    %62 = vset.pattern.permute.xlu0 1
    %63 = vperm.xlu0 %62, %v23
    %v64 = vpop.permute.xlu0 %63
    %66 = vset.pattern.permute.xlu0 1
    %67 = vperm.xlu0 %66, %v24
    %v68 = vpop.permute.xlu0 %67
    %70 = vset.pattern.permute.xlu0 1
    %71 = vperm.xlu0 %70, %v25
    %v72 = vpop.permute.xlu0 %71
    %v74 = vlaneseq
    %v75 = vshrl.u32 %v74, 7
    %v76 = vsub.s32 1, %v75
    %v77 = vrot.slane %v21, %v76
    %v78 = vmul.f32 %v60, %v77
    %v79 = vmul.f32 %v64, %v77
    %v80 = vmul.f32 %v68, %v77
    %v81 = vmul.f32 %v72, %v77
    %v82 = vadd.f32 %v54, %v78
    %v83 = vadd.f32 %v55, %v79
    %v84 = vadd.f32 %v56, %v80
    %v85 = vadd.f32 %v57, %v81
    %87 = vset.pattern.permute.xlu0 0
    %88 = vperm.xlu0 %87, %v26
    %v89 = vpop.permute.xlu0 %88
    %92 = vset.pattern.permute.xlu0 0
    %93 = vperm.xlu0 %92, %v27
    %v94 = vpop.permute.xlu0 %93
    %97 = vset.pattern.permute.xlu0 0
    %98 = vperm.xlu0 %97, %v28
    %v99 = vpop.permute.xlu0 %98
    %102 = vset.pattern.permute.xlu0 0
    %103 = vperm.xlu0 %102, %v29
    %v104 = vpop.permute.xlu0 %103
    %v106 = vadd.f32 %v82, %v89
    %v107 = vadd.f32 %v83, %v94
    %v108 = vadd.f32 %v84, %v99
    %v109 = vadd.f32 %v85, %v104
    %v110 = vmax.f32 %v106, 0.0
    %v111 = vmax.f32 %v107, 0.0
    %v112 = vmax.f32 %v108, 0.0
    %v113 = vmax.f32 %v109, 0.0
    %v114 = vld [vmem:[%s3] sm:$0xff]
    %v115 = vld [vmem:[%s4] sm:$0xff]
    %117 = vset.pattern.permute.xlu0 0
    %118 = vperm.xlu0 %117, %v115
    %v119 = vpop.permute.xlu0 %118
    %vm121 = vcmask 261120
    %v123 = vsel %vm121, %v114, 0
    %125 = vmatprep.subr.mxu0 0.0
    %126 = vmatpush1.msra.mxu0 %v110
    %127 = vmatprep.subr.mxu0 0.0
    %128 = vmatpush1.msra.mxu0 %v111
    %129 = vmatprep.subr.mxu0 0.0
    %130 = vmatpush1.msra.mxu0 %v112
    %131 = vmatprep.subr.mxu0 0.0
    %132 = vmatpush1.msra.mxu0 %v113
    %133 = vmatprep.subr.mxu0 0.0
    %134 = vmatpush1.msra.mxu0 0.0
    %135 = vmatprep.subr.mxu0 0.0
    %136 = vmatpush1.msra.mxu0 0.0
    %137 = vmatprep.subr.mxu0 0.0
    %138 = vmatpush1.msra.mxu0 0.0
    %139 = vmatprep.subr.mxu0 0.0
    %140 = vmatpush1.msra.mxu0 0.0
    %141 = vmatprep.subr.mxu0 0.0
    %142 = vmatpush1.msra.mxu0 0.0
    %143 = vmatprep.subr.mxu0 0.0
    %144 = vmatpush1.msra.mxu0 0.0
    %145 = vmatprep.subr.mxu0 0.0
    %146 = vmatpush1.msra.mxu0 0.0
    %147 = vmatprep.subr.mxu0 0.0
    %148 = vmatpush1.msra.mxu0 0.0
    %149 = vmatprep.subr.mxu0 0.0
    %150 = vmatpush1.msra.mxu0 0.0
    %151 = vmatprep.subr.mxu0 0.0
    %152 = vmatpush1.msra.mxu0 0.0
    %153 = vmatprep.subr.mxu0 0.0
    %154 = vmatpush1.msra.mxu0 0.0
    %155 = vmatprep.subr.mxu0 0.0
    %156 = vmatpush1.msra.mxu0 0.0
    %157 = vmatprep.subr.mxu0 0.0
    %158 = vmatpush1.msra.mxu0 0.0
    %159 = vmatprep.subr.mxu0 0.0
    %160 = vmatpush1.msra.mxu0 0.0
    %161 = vmatprep.subr.mxu0 0.0
    %162 = vmatpush1.msra.mxu0 0.0
    %163 = vmatprep.subr.mxu0 0.0
    %164 = vmatpush1.msra.mxu0 0.0
    %165 = vmatprep.subr.mxu0 0.0
    %166 = vmatpush1.msra.mxu0 0.0
    %167 = vmatprep.subr.mxu0 0.0
    %168 = vmatpush1.msra.mxu0 0.0
    %169 = vmatprep.subr.mxu0 0.0
    %170 = vmatpush1.msra.mxu0 0.0
    %171 = vmatprep.subr.mxu0 0.0
    %172 = vmatpush1.msra.mxu0 0.0
    %173 = vmatprep.subr.mxu0 0.0
    %174 = vmatpush1.msra.mxu0 0.0
    %175 = vmatprep.subr.mxu0 0.0
    %176 = vmatpush1.msra.mxu0 0.0
    %177 = vmatprep.subr.mxu0 0.0
    %178 = vmatpush1.msra.mxu0 0.0
    %179 = vmatprep.subr.mxu0 0.0
    %180 = vmatpush1.msra.mxu0 0.0
    %181 = vmatprep.subr.mxu0 0.0
    %182 = vmatpush1.msra.mxu0 0.0
    %183 = vmatprep.subr.mxu0 0.0
    %184 = vmatpush1.msra.mxu0 0.0
    %185 = vmatprep.subr.mxu0 0.0
    %186 = vmatpush1.msra.mxu0 0.0
    %187 = vmatprep.subr.mxu0 0.0
    %188 = vmatpush1.msra.mxu0 0.0
    %189 = vmatprep.mubr.f32.mxu0 0.0
    %190 = vmatmul.mubr.f32.gmra.mrb[0].mxu0 %v123
    %v191 = vpop.f32.mrb[0].mxu0
    %v192 = vadd.f32 %v119, %v191
    %v193 = vpop.f32.mrb[0].mxu0
    %194 = vdwg.mxu0
    %195 = vst [vmem:[#allocation2] sm:$0xff] %v192
    // Predicated region
    $region22: #{tpu_custom_call.1} parent=1 // pred_check
      _
    $region23: #{tpu_custom_call.1} parent=1 // pred_check_branch
      %197 = sbr.rel (0) target = $region25
    $region24: #{tpu_custom_call.1} parent=1 // pred_region
      %s199 = ssub.s32 128, 128
      %200 = vsyncadd [#allocation3], %s199
      %s202 = sshll.u32 [#allocation2], 4
      %s203 = int_to_ptr.vmem [resolvable:$true] %s202
      %205 = dma.vmem_to_hbm [thread:$0]  %s203, 128, %s5, [#allocation3]
    $region25: #{tpu_custom_call.1} parent=1 // pred_fallthru
      _
    // Predicated region
    $region26: #{tpu_custom_call.1} parent=1 // pred_check
      _
    $region27: #{tpu_custom_call.1} parent=1 // pred_check_branch
      %207 = sbr.rel (0) target = $region29
    $region28: #{tpu_custom_call.1} parent=1 // pred_region
      %208 = dma.done [#allocation3], 128
    $region29: #{tpu_custom_call.1} parent=1 // pred_fallthru
      _
    %209 = vsyncpa [#allocation3], 1

</llo_original>
